<compile_context>
chip_gen: v7x
topology: tpu7x:2x2x1
jax: 0.10.0
libtpu: 0.0.40
codegen_flags: <defaults>
</compile_context>

<pallas_src>
import functools

import jax
import jax.numpy as jnp
from jax.experimental import pallas as pl
from jax.experimental.pallas import tpu as pltpu


def _pick_tile(dim, candidates):
    """Largest candidate tile that evenly divides `dim`; fall back to the full dim."""
    for c in candidates:
        if dim >= c and dim % c == 0:
            return c
    return dim


# ----------------------------------------------------------------------------
# Fused linear: out = x @ w + b   (x: (M, K), w: (K, N), b: (1, N))
# ----------------------------------------------------------------------------
def _linear_kernel(x_ref, w_ref, b_ref, o_ref, acc_ref):
    @pl.when(pl.program_id(2) == 0)
    def _():
        acc_ref[...] = jnp.zeros_like(acc_ref)

    acc_ref[...] += jnp.dot(
        x_ref[...], w_ref[...], preferred_element_type=jnp.float32
    )

    @pl.when(pl.program_id(2) == pl.num_programs(2) - 1)
    def _():
        o_ref[...] = (acc_ref[...] + b_ref[...].astype(jnp.float32)).astype(o_ref.dtype)


def linear(x2, w_t, b_row):
    M, K = x2.shape
    N = w_t.shape[1]
    tm = _pick_tile(M, (256, 128, 64, 32, 16, 8))
    tn = _pick_tile(N, (256, 128))          # lane-dense output where possible
    tk = _pick_tile(K, (512, 256, 128))
    return pl.pallas_call(
        _linear_kernel,
        out_shape=jax.ShapeDtypeStruct((M, N), x2.dtype),
        grid_spec=pltpu.PrefetchScalarGridSpec(
            num_scalar_prefetch=0,
            grid=(M // tm, N // tn, K // tk),
            in_specs=[
                pl.BlockSpec((tm, tk), lambda i, j, k: (i, k)),
                pl.BlockSpec((tk, tn), lambda i, j, k: (k, j)),
                pl.BlockSpec((1, tn), lambda i, j, k: (0, j)),
            ],
            out_specs=pl.BlockSpec((tm, tn), lambda i, j, k: (i, j)),
            scratch_shapes=[pltpu.VMEM((tm, tn), jnp.float32)],
        ),
        compiler_params=pltpu.CompilerParams(
            dimension_semantics=("parallel", "parallel", "arbitrary"),
        ),
    )(x2, w_t, b_row)


# ----------------------------------------------------------------------------
# Flash attention (online softmax), q/k/v: (B*H, T, head_dim)
# ----------------------------------------------------------------------------
def _flash_kernel(q_ref, k_ref, v_ref, o_ref, m_sc, l_sc, acc_sc,
                  *, scale, causal, tq, tk):
    qi = pl.program_id(1)
    ki = pl.program_id(2)

    @pl.when(ki == 0)
    def _():
        m_sc[...] = jnp.full_like(m_sc, -jnp.inf)
        l_sc[...] = jnp.zeros_like(l_sc)
        acc_sc[...] = jnp.zeros_like(acc_sc)

    q = q_ref[0].astype(jnp.float32)                      # (tq, hd)
    k = k_ref[0].astype(jnp.float32)                      # (tk, hd)
    s = scale * jax.lax.dot_general(
        q, k, (((1,), (1,)), ((), ())), preferred_element_type=jnp.float32
    )                                                      # (tq, tk)

    if causal:
        q_pos = qi * tq + jax.lax.broadcasted_iota(jnp.int32, (tq, tk), 0)
        k_pos = ki * tk + jax.lax.broadcasted_iota(jnp.int32, (tq, tk), 1)
        s = jnp.where(q_pos >= k_pos, s, -1e30)

    m_prev = m_sc[...]
    m_new = jnp.maximum(m_prev, jnp.max(s, axis=-1, keepdims=True))
    alpha = jnp.exp(m_prev - m_new)
    p = jnp.exp(s - m_new)
    l_sc[...] = alpha * l_sc[...] + jnp.sum(p, axis=-1, keepdims=True)
    acc_sc[...] = alpha * acc_sc[...] + jnp.dot(
        p, v_ref[0].astype(jnp.float32), preferred_element_type=jnp.float32
    )
    m_sc[...] = m_new

    @pl.when(ki == pl.num_programs(2) - 1)
    def _():
        o_ref[0] = (acc_sc[...] / l_sc[...]).astype(o_ref.dtype)


def flash_attention(q, k, v, *, scale, causal):
    BH, T, hd = q.shape
    tq = _pick_tile(T, (128, 64, 32, 16, 8))
    tkv = _pick_tile(T, (128, 64, 32, 16, 8))
    kernel = functools.partial(_flash_kernel, scale=scale, causal=causal, tq=tq, tk=tkv)
    return pl.pallas_call(
        kernel,
        out_shape=jax.ShapeDtypeStruct((BH, T, hd), q.dtype),
        grid_spec=pltpu.PrefetchScalarGridSpec(
            num_scalar_prefetch=0,
            grid=(BH, T // tq, T // tkv),
            in_specs=[
                pl.BlockSpec((1, tq, hd), lambda b, i, j: (b, i, 0)),
                pl.BlockSpec((1, tkv, hd), lambda b, i, j: (b, j, 0)),
                pl.BlockSpec((1, tkv, hd), lambda b, i, j: (b, j, 0)),
            ],
            out_specs=pl.BlockSpec((1, tq, hd), lambda b, i, j: (b, i, 0)),
            scratch_shapes=[
                pltpu.VMEM((tq, 1), jnp.float32),   # running max
                pltpu.VMEM((tq, 1), jnp.float32),   # running denom
                pltpu.VMEM((tq, hd), jnp.float32),  # output accumulator
            ],
        ),
        compiler_params=pltpu.CompilerParams(
            dimension_semantics=("parallel", "parallel", "arbitrary"),
        ),
    )(q, k, v)


# ----------------------------------------------------------------------------
# SelfAttention.forward (inference: dropout_p = 0)
# ----------------------------------------------------------------------------
def self_attention(x, w_attn, b_attn, w_proj, b_proj, *, n_head, causal):
    # TODO(synk): attn/resid dropout not implemented (inference forward, p = 0).
    B, T, C = x.shape
    hd = C // n_head
    scale = 8.0 / C                      # softmax_scale = 8 / n_embd (from the module)

    x2 = x.reshape(B * T, C)
    qkv = linear(x2, w_attn.T, b_attn.reshape(1, -1))          # (B*T, 3C)
    qkv = qkv.reshape(B, T, 3, n_head, hd)

    def heads(a):                                              # (B,T,H,hd) -> (B*H,T,hd)
        return a.transpose(0, 2, 1, 3).reshape(B * n_head, T, hd)

    q, k, v = heads(qkv[:, :, 0]), heads(qkv[:, :, 1]), heads(qkv[:, :, 2])

    y = flash_attention(q, k, v, scale=scale, causal=causal)   # (B*H, T, hd)
    y = y.reshape(B, n_head, T, hd).transpose(0, 2, 1, 3).reshape(B * T, C)

    out = linear(y, w_proj.T, b_proj.reshape(1, -1))
    return out.reshape(B, T, C)


# ----------------------------------------------------------------------------
# Pure-JAX reference
# ----------------------------------------------------------------------------
def _reference(x, w_attn, b_attn, w_proj, b_proj, *, n_head, causal):
    B, T, C = x.shape
    hd = C // n_head
    scale = 8.0 / C
    qkv = x @ w_attn.T + b_attn
    qkv = qkv.reshape(B, T, 3, n_head, hd)
    q = qkv[:, :, 0].transpose(0, 2, 1, 3)
    k = qkv[:, :, 1].transpose(0, 2, 1, 3)
    v = qkv[:, :, 2].transpose(0, 2, 1, 3)
    s = jnp.einsum("bhqd,bhkd->bhqk", q, k) * scale
    if causal:
        mask = jnp.tril(jnp.ones((T, T), dtype=bool))
        s = jnp.where(mask, s, -jnp.inf)
    p = jax.nn.softmax(s, axis=-1)
    y = jnp.einsum("bhqk,bhkd->bhqd", p, v)
    y = y.transpose(0, 2, 1, 3).reshape(B, T, C)
    return y @ w_proj.T + b_proj


if __name__ == "__main__":
    batch, seq, n_embd, n_head = 2, 8, 32, 4
    param_std = 0.02
    causal = True                         # config.autoregressive

    key = jax.random.PRNGKey(0)
    k_x, k_wa, k_wp = jax.random.split(key, 3)
    x = jax.random.normal(k_x, (batch, seq, n_embd), dtype=jnp.float32)
    # c_attn / c_proj weight init: normal(std=param_std); biases zero-init (as in the module)
    w_attn = param_std * jax.random.normal(k_wa, (3 * n_embd, n_embd), dtype=jnp.float32)
    w_proj = param_std * jax.random.normal(k_wp, (n_embd, n_embd), dtype=jnp.float32)
    b_attn = jnp.zeros((3 * n_embd,), jnp.float32)
    b_proj = jnp.zeros((n_embd,), jnp.float32)

    out = self_attention(x, w_attn, b_attn, w_proj, b_proj, n_head=n_head, causal=causal)
    jax.block_until_ready(out)

    ref = _reference(x, w_attn, b_attn, w_proj, b_proj, n_head=n_head, causal=causal)
    assert out.shape == x.shape and out.dtype == x.dtype
    assert jnp.allclose(out, ref, atol=1e-4, rtol=1e-4), "mismatch vs reference"
    print("KERNEL_OK")
</pallas_src>

<mosaic_0001>
module attributes {stable_mosaic.version = 11 : i64} {
  func.func @_linear_kernel(%arg0: i32, %arg1: i32, %arg2: i32, %arg3: memref<16x32xf32, #tpu.memory_space<vmem>>, %arg4: memref<32x96xf32, #tpu.memory_space<vmem>>, %arg5: memref<1x96xf32, #tpu.memory_space<vmem>>, %arg6: memref<16x96xf32, #tpu.memory_space<vmem>>, %arg7: memref<16x96xf32, #tpu.memory_space<vmem>>) attributes {dimension_semantics = [#tpu.dimension_semantics<parallel>, #tpu.dimension_semantics<parallel>, #tpu.dimension_semantics<arbitrary>], iteration_bounds = array<i64: 1, 1, 1>, scalar_prefetch = 0 : i64, scratch_operands = 1 : i64, tpu.core_type = #tpu.core_type<tc>, window_params = [{transform_indices = @transform_0, window_bounds = array<i64: 16, 32>}, {transform_indices = @transform_1, window_bounds = array<i64: 32, 96>}, {transform_indices = @transform_2, window_bounds = array<i64: 1, 96>}, {transform_indices = @transform_3, window_bounds = array<i64: 16, 96>}]} {
    %c0_i32 = arith.constant 0 : i32
    %0 = arith.cmpi eq, %arg2, %c0_i32 : i32
    %1 = arith.extui %0 : i1 to i32
    %c0_i32_0 = arith.constant 0 : i32
    %2 = arith.cmpi ne, %1, %c0_i32_0 : i32
    scf.if %2 {
      %cst_10 = arith.constant 0.000000e+00 : f32
      %12 = vector.broadcast %cst_10 : f32 to vector<16x96xf32>
      %c0_11 = arith.constant 0 : index
      %c0_12 = arith.constant 0 : index
      %13 = vector.load %arg7[%c0_11, %c0_12] : memref<16x96xf32, #tpu.memory_space<vmem>>, vector<16x96xf32>
      tpu.vector_store %arg7[%c0_11, %c0_12], %12 {strides = array<i32>} : memref<16x96xf32, #tpu.memory_space<vmem>>, vector<16x96xf32>,
    } else {
    }
    %c0 = arith.constant 0 : index
    %c0_1 = arith.constant 0 : index
    %3 = vector.load %arg7[%c0, %c0_1] : memref<16x96xf32, #tpu.memory_space<vmem>>, vector<16x96xf32>
    %c0_2 = arith.constant 0 : index
    %c0_3 = arith.constant 0 : index
    %4 = vector.load %arg3[%c0_2, %c0_3] : memref<16x32xf32, #tpu.memory_space<vmem>>, vector<16x32xf32>
    %c0_4 = arith.constant 0 : index
    %c0_5 = arith.constant 0 : index
    %5 = vector.load %arg4[%c0_4, %c0_5] : memref<32x96xf32, #tpu.memory_space<vmem>>, vector<32x96xf32>
    %cst = arith.constant dense<0.000000e+00> : vector<16x96xf32>
    %6 = tpu.matmul %4, %5, %cst {dimension_numbers = #tpu.dot_dimension_numbers<[1], [0], [0], [1], [0, 0, 1, 1], [], []>} : vector<16x32xf32>, vector<32x96xf32>, vector<16x96xf32> -> vector<16x96xf32>
    %7 = arith.addf %3, %6 : vector<16x96xf32>
    %c0_6 = arith.constant 0 : index
    %c0_7 = arith.constant 0 : index
    %8 = vector.load %arg7[%c0_6, %c0_7] : memref<16x96xf32, #tpu.memory_space<vmem>>, vector<16x96xf32>
    tpu.vector_store %arg7[%c0_6, %c0_7], %7 {strides = array<i32>} : memref<16x96xf32, #tpu.memory_space<vmem>>, vector<16x96xf32>,
    %c0_i32_8 = arith.constant 0 : i32
    %9 = arith.cmpi eq, %arg2, %c0_i32_8 : i32
    %10 = arith.extui %9 : i1 to i32
    %c0_i32_9 = arith.constant 0 : i32
    %11 = arith.cmpi ne, %10, %c0_i32_9 : i32
    scf.if %11 {
      %c0_10 = arith.constant 0 : index
      %c0_11 = arith.constant 0 : index
      %12 = vector.load %arg7[%c0_10, %c0_11] : memref<16x96xf32, #tpu.memory_space<vmem>>, vector<16x96xf32>
      %c0_12 = arith.constant 0 : index
      %c0_13 = arith.constant 0 : index
      %13 = vector.load %arg5[%c0_12, %c0_13] : memref<1x96xf32, #tpu.memory_space<vmem>>, vector<1x96xf32>
      %14 = vector.broadcast %13 : vector<1x96xf32> to vector<16x96xf32>
      %15 = arith.addf %12, %14 : vector<16x96xf32>
      %c0_14 = arith.constant 0 : index
      %c0_15 = arith.constant 0 : index
      %16 = vector.load %arg6[%c0_14, %c0_15] : memref<16x96xf32, #tpu.memory_space<vmem>>, vector<16x96xf32>
      tpu.vector_store %arg6[%c0_14, %c0_15], %15 {strides = array<i32>} : memref<16x96xf32, #tpu.memory_space<vmem>>, vector<16x96xf32>,
    } else {
    }
    return
  }
  func.func @transform_0(%arg0: i32, %arg1: i32, %arg2: i32) -> (i32, i32) {
    %c0_i32 = arith.constant 0 : i32
    return %arg0, %arg2 : i32, i32
  }
  func.func @transform_1(%arg0: i32, %arg1: i32, %arg2: i32) -> (i32, i32) {
    %c0_i32 = arith.constant 0 : i32
    return %arg2, %arg1 : i32, i32
  }
  func.func @transform_2(%arg0: i32, %arg1: i32, %arg2: i32) -> (i32, i32) {
    %c0_i32 = arith.constant 0 : i32
    %c0_i32_0 = arith.constant 0 : i32
    return %c0_i32, %arg1 : i32, i32
  }
  func.func @transform_3(%arg0: i32, %arg1: i32, %arg2: i32) -> (i32, i32) {
    %c0_i32 = arith.constant 0 : i32
    return %arg0, %arg1 : i32, i32
  }
}

</mosaic_0001>

<llo_original>
// kernel: tpu_custom_call.1
$region0: #{tpu_custom_call.1}
  #allocation0 [shape = 'u32[]', space=smem, size = 0x4, offset = 0x4, fixed_abs, tag = 'smem constant byte address 0x4 - core index']
  #allocation1 [shape = 'u32[144,128]{1,0:T(1,128)}', space=vmem, size = 0x12000, scoped, tag = 'internal scratch']
  #allocation2 [shape = 'f32[16,96]{1,0:T(8,128)}', space=vmem, size = 0x2000, scoped, tag = 'scratch operand']
  %s0 = inlined_call_operand.hbm [shape: f32[16,32], index: 0, kind: input, shape index: {}]
  %s1 = inlined_call_operand.hbm [shape: f32[32,96], index: 1, kind: input, shape index: {}]
  %s2 = inlined_call_operand.vmem [shape: f32[1,96], index: 2, kind: input, shape index: {}]
  %s3 = inlined_call_operand.hbm [shape: f32[16,96], index: 3, kind: output, shape index: {}]
  %s4 = sld [smem:[#allocation0]]
  $region38: #{tpu_custom_call.1} parent=0
    _
  %s6 = ssub.s32 1, %s4
  %s7 = scalar_select 0, %s6, %s4
  $region1: #{tpu_custom_call.1} parent=0
    #allocation3 [shape = 'u8[8192]{0}', space=vmem, size = 0x2000, scoped, tag = 'input window, operand 0, single buffered']
    #allocation4 [shape = 's32[1]{0}', space=sflag, size = 0x4, scoped, tag = 'scoped memory for tpu_custom_call.1']
    #allocation5 [shape = 's32[1]{0}', space=sflag, size = 0x4, scoped, tag = 'scoped memory for tpu_custom_call.1']
    #allocation6 [shape = 'u8[16384]{0}', space=vmem, size = 0x4000, scoped, tag = 'input window, operand 1, single buffered']
    #allocation7 [shape = 's32[1]{0}', space=sflag, size = 0x4, scoped, tag = 'scoped memory for tpu_custom_call.1']
    #allocation8 [shape = 'u8[8192]{0}', space=vmem, size = 0x2000, scoped, tag = 'output window, operand 0, single buffered']
    %8 = vsyncpa [#allocation4], 0
    %9 = vsyncpa [#allocation7], 0
    %10 = vsyncpa [#allocation5], 0
    // Predicated region
    $region2: #{tpu_custom_call.1} parent=1 // pred_check
      _
    $region3: #{tpu_custom_call.1} parent=1 // pred_check_branch
      %12 = sbr.rel (0) target = $region5
    $region4: #{tpu_custom_call.1} parent=1 // pred_region
      %s14 = ssub.s32 256, 256
      %15 = vsyncadd [#allocation4], %s14
      %s16 = sshll.u32 [#allocation3], 4
      %s17 = int_to_ptr.vmem [resolvable:$true] %s16
      %22 = dma.hbm_to_vmem [thread:$0]  %s0, 256, %s17, [#allocation4], 128, 128, 8
    $region5: #{tpu_custom_call.1} parent=1 // pred_fallthru
      _
    // Predicated region
    $region6: #{tpu_custom_call.1} parent=1 // pred_check
      _
    $region7: #{tpu_custom_call.1} parent=1 // pred_check_branch
      %24 = sbr.rel (0) target = $region9
    $region8: #{tpu_custom_call.1} parent=1 // pred_region
      %s26 = ssub.s32 512, 512
      %27 = vsyncadd [#allocation7], %s26
      %s28 = sshll.u32 [#allocation6], 4
      %s29 = int_to_ptr.vmem [resolvable:$true] %s28
      %34 = dma.hbm_to_vmem [thread:$0]  %s1, 512, %s29, [#allocation7], 128, 128, 8
    $region9: #{tpu_custom_call.1} parent=1 // pred_fallthru
      _
    // Predicated region
    $region10: #{tpu_custom_call.1} parent=1 // pred_check
      _
    $region11: #{tpu_custom_call.1} parent=1 // pred_check_branch
      %36 = sbr.rel (0) target = $region13
    $region12: #{tpu_custom_call.1} parent=1 // pred_region
      _
    $region13: #{tpu_custom_call.1} parent=1 // pred_fallthru
      _
    // Predicated region
    $region14: #{tpu_custom_call.1} parent=1 // pred_check
      _
    $region15: #{tpu_custom_call.1} parent=1 // pred_check_branch
      %38 = sbr.rel (0) target = $region17
    $region16: #{tpu_custom_call.1} parent=1 // pred_region
      %39 = dma.done [#allocation4], 256
    $region17: #{tpu_custom_call.1} parent=1 // pred_fallthru
      _
    // Predicated region
    $region18: #{tpu_custom_call.1} parent=1 // pred_check
      _
    $region19: #{tpu_custom_call.1} parent=1 // pred_check_branch
      %41 = sbr.rel (0) target = $region21
    $region20: #{tpu_custom_call.1} parent=1 // pred_region
      %42 = dma.done [#allocation7], 512
    $region21: #{tpu_custom_call.1} parent=1 // pred_fallthru
      _
    %p43 = scmp.eq.s32.totalorder 0, 0
    // Predicated region
    $region22: #{tpu_custom_call.1} parent=1 // pred_check
      %p44 = pneg %p43
    $region23: #{tpu_custom_call.1} parent=1 // pred_check_branch
      %46 = sbr.rel (%p44) target = $region25
    $region24: #{tpu_custom_call.1} parent=1 // pred_region
      %vm47 = vcmask 785408
      %48 = vst.msk [vmem:[#allocation2] sm:$0xff] %vm47, 0.0
      %49 = vst.msk [vmem:[#allocation2 + $0x8] sm:$0xff] %vm47, 0.0
    $region25: #{tpu_custom_call.1} parent=1 // pred_fallthru
      _
    %v50 = vld [vmem:[#allocation2] sm:$0xff]
    %v51 = vld [vmem:[#allocation2 + $0x8] sm:$0xff]
    %v52 = vld [vmem:[#allocation3] sm:$0xff]
    %v53 = vld [vmem:[#allocation3 + $0x8] sm:$0xff]
    %v54 = vld [vmem:[#allocation6] sm:$0xff]
    %v55 = vld [vmem:[#allocation6 + $0x8] sm:$0xff]
    %v56 = vld [vmem:[#allocation6 + $0x10] sm:$0xff]
    %v57 = vld [vmem:[#allocation6 + $0x18] sm:$0xff]
    %vm58 = vcmask 261120
    %v60 = vsel %vm58, %v52, 0
    %v63 = vsel %vm58, %v53, 0
    %65 = vmatprep.subr.mxu0 0.0
    %66 = vmatpush1.msra.mxu0 %v54
    %67 = vmatprep.subr.mxu0 0.0
    %68 = vmatpush1.msra.mxu0 %v55
    %69 = vmatprep.subr.mxu0 0.0
    %70 = vmatpush1.msra.mxu0 %v56
    %71 = vmatprep.subr.mxu0 0.0
    %72 = vmatpush1.msra.mxu0 %v57
    %73 = vmatprep.subr.mxu0 0.0
    %74 = vmatpush1.msra.mxu0 0.0
    %75 = vmatprep.subr.mxu0 0.0
    %76 = vmatpush1.msra.mxu0 0.0
    %77 = vmatprep.subr.mxu0 0.0
    %78 = vmatpush1.msra.mxu0 0.0
    %79 = vmatprep.subr.mxu0 0.0
    %80 = vmatpush1.msra.mxu0 0.0
    %81 = vmatprep.subr.mxu0 0.0
    %82 = vmatpush1.msra.mxu0 0.0
    %83 = vmatprep.subr.mxu0 0.0
    %84 = vmatpush1.msra.mxu0 0.0
    %85 = vmatprep.subr.mxu0 0.0
    %86 = vmatpush1.msra.mxu0 0.0
    %87 = vmatprep.subr.mxu0 0.0
    %88 = vmatpush1.msra.mxu0 0.0
    %89 = vmatprep.subr.mxu0 0.0
    %90 = vmatpush1.msra.mxu0 0.0
    %91 = vmatprep.subr.mxu0 0.0
    %92 = vmatpush1.msra.mxu0 0.0
    %93 = vmatprep.subr.mxu0 0.0
    %94 = vmatpush1.msra.mxu0 0.0
    %95 = vmatprep.subr.mxu0 0.0
    %96 = vmatpush1.msra.mxu0 0.0
    %97 = vmatprep.subr.mxu0 0.0
    %98 = vmatpush1.msra.mxu0 0.0
    %99 = vmatprep.subr.mxu0 0.0
    %100 = vmatpush1.msra.mxu0 0.0
    %101 = vmatprep.subr.mxu0 0.0
    %102 = vmatpush1.msra.mxu0 0.0
    %103 = vmatprep.subr.mxu0 0.0
    %104 = vmatpush1.msra.mxu0 0.0
    %105 = vmatprep.subr.mxu0 0.0
    %106 = vmatpush1.msra.mxu0 0.0
    %107 = vmatprep.subr.mxu0 0.0
    %108 = vmatpush1.msra.mxu0 0.0
    %109 = vmatprep.subr.mxu0 0.0
    %110 = vmatpush1.msra.mxu0 0.0
    %111 = vmatprep.subr.mxu0 0.0
    %112 = vmatpush1.msra.mxu0 0.0
    %113 = vmatprep.subr.mxu0 0.0
    %114 = vmatpush1.msra.mxu0 0.0
    %115 = vmatprep.subr.mxu0 0.0
    %116 = vmatpush1.msra.mxu0 0.0
    %117 = vmatprep.subr.mxu0 0.0
    %118 = vmatpush1.msra.mxu0 0.0
    %119 = vmatprep.subr.mxu0 0.0
    %120 = vmatpush1.msra.mxu0 0.0
    %121 = vmatprep.subr.mxu0 0.0
    %122 = vmatpush1.msra.mxu0 0.0
    %123 = vmatprep.subr.mxu0 0.0
    %124 = vmatpush1.msra.mxu0 0.0
    %125 = vmatprep.subr.mxu0 0.0
    %126 = vmatpush1.msra.mxu0 0.0
    %127 = vmatprep.subr.mxu0 0.0
    %128 = vmatpush1.msra.mxu0 0.0
    %129 = vmatprep.mubr.f32.mxu0 0.0
    %130 = vmatmul.mubr.f32.gmra.mrb[0].mxu0 %v60
    %v131 = vpop.f32.mrb[0].mxu0
    %v132 = vadd.f32 0.0, %v131
    %v133 = vpop.f32.mrb[0].mxu0
    %134 = vmatprep.mubr.f32.mxu0 0.0
    %135 = vmatmul.mubr.f32.gmra.mrb[0].mxu0 %v63
    %v136 = vpop.f32.mrb[0].mxu0
    %v137 = vadd.f32 0.0, %v136
    %v138 = vpop.f32.mrb[0].mxu0
    %139 = vdwg.mxu0
    %v140 = vadd.f32 %v50, %v132
    %v141 = vadd.f32 %v51, %v137
    %vm142 = vcmask 785408
    %143 = vst.msk [vmem:[#allocation2] sm:$0xff] %vm142, %v140
    %144 = vst.msk [vmem:[#allocation2 + $0x8] sm:$0xff] %vm142, %v141
    // Predicated region
    $region26: #{tpu_custom_call.1} parent=1 // pred_check
      %p145 = pneg %p43
    $region27: #{tpu_custom_call.1} parent=1 // pred_check_branch
      %147 = sbr.rel (%p145) target = $region29
    $region28: #{tpu_custom_call.1} parent=1 // pred_region
      %v148 = vld [vmem:[#allocation2] sm:$0xff]
      %v149 = vld [vmem:[#allocation2 + $0x8] sm:$0xff]
      %v150 = vld [vmem:[%s2] sm:$0x1]
      %v152 = vlaneseq
      %v153 = vshrl.u32 %v152, 7
      %v154 = vsub.s32 0, %v153
      %v155 = vrot.slane %v150, %v154
      %v157 = vadd.f32 %v148, %v155
      %v158 = vadd.f32 %v149, %v155
      %159 = vst.msk [vmem:[#allocation8] sm:$0xff] %vm142, %v157
      %160 = vst.msk [vmem:[#allocation8 + $0x8] sm:$0xff] %vm142, %v158
    $region29: #{tpu_custom_call.1} parent=1 // pred_fallthru
      _
    // Predicated region
    $region30: #{tpu_custom_call.1} parent=1 // pred_check
      _
    $region31: #{tpu_custom_call.1} parent=1 // pred_check_branch
      %162 = sbr.rel (0) target = $region33
    $region32: #{tpu_custom_call.1} parent=1 // pred_region
      %s164 = ssub.s32 256, 256
      %165 = vsyncadd [#allocation5], %s164
      %s166 = sshll.u32 [#allocation8], 4
      %s167 = int_to_ptr.vmem [resolvable:$true] %s166
      %172 = dma.vmem_to_hbm [thread:$0]  %s167, 256, %s3, [#allocation5], 128, 128, 8
    $region33: #{tpu_custom_call.1} parent=1 // pred_fallthru
      _
    // Predicated region
    $region34: #{tpu_custom_call.1} parent=1 // pred_check
      _
    $region35: #{tpu_custom_call.1} parent=1 // pred_check_branch
      %174 = sbr.rel (0) target = $region37
    $region36: #{tpu_custom_call.1} parent=1 // pred_region
      %175 = dma.done [#allocation5], 256
    $region37: #{tpu_custom_call.1} parent=1 // pred_fallthru
      _
    %176 = vsyncpa [#allocation4], 1
    %177 = vsyncpa [#allocation7], 1
    %178 = vsyncpa [#allocation5], 1

</llo_original>
